<compile_context>
chip_gen: v7x
topology: tpu7x:2x2x1
jax: 0.10.0
libtpu: 0.0.40
codegen_flags: <defaults>
</compile_context>

<pallas_src>
import functools
import math

import jax
import jax.numpy as jnp
from jax.experimental import pallas as pl
from jax.experimental.pallas import tpu as pltpu

_LANE = 128


def _round_up(x, m):
    return (x + m - 1) // m * m


def _sage_layer_kernel(a_ref, hs_ref, hd_ref, w_ref, b_ref, o_ref, acc_ref, *,
                       apply_relu):
    """One fused SAGEConv('mean') layer, tiled over (dst rows i, src cols k).

    a_ref  : (tm, tk)              row-normalized adjacency tile (bf16)
    hs_ref : (tk, fin_pad)         source-node feature slab (K tile of H)
    hd_ref : (tm, fin_pad)         destination-node feature tile (row tile of H)
    w_ref  : (2*fin_pad, fout_pad) stacked [W_self; W_neigh] (bf16)
    b_ref  : (1, fout_pad)         bias (f32)
    o_ref  : (tm, fout_pad)        output tile (resident across k)
    acc_ref: (tm, fin_pad) f32     h_neigh accumulator (resident across k)
    """
    k = pl.program_id(1)

    @pl.when(k == 0)
    def _():
        acc_ref[...] = jnp.zeros_like(acc_ref)

    # Mean aggregation over this K-slab of source nodes (MXU, f32 accumulate).
    acc_ref[...] += jnp.dot(a_ref[...], hs_ref[...],
                            preferred_element_type=jnp.float32)

    @pl.when(k == pl.num_programs(1) - 1)
    def _():
        h_neigh = acc_ref[...].astype(hd_ref.dtype)
        # Fused self+neighbor projection: one MXU pass with K = 2*fin_pad.
        h_cat = jnp.concatenate([hd_ref[...], h_neigh], axis=-1)
        out = jnp.dot(h_cat, w_ref[...],
                      preferred_element_type=jnp.float32) + b_ref[...]
        if apply_relu:
            out = jnp.maximum(out, 0.0)
        o_ref[...] = out.astype(o_ref.dtype)


def sage_layer(adj, h, w_stacked, bias, *, apply_relu, out_dtype,
               tm=128, tk=128):
    """Run one fused SAGEConv layer as a tiled Pallas kernel."""
    n_dst, n_src = adj.shape
    fin_pad = h.shape[1]
    fout_pad = w_stacked.shape[1]
    assert n_dst % tm == 0 and n_src % tk == 0
    assert w_stacked.shape[0] == 2 * fin_pad
    grid = (n_dst // tm, n_src // tk)

    flops = 2 * n_dst * n_src * fin_pad + 2 * n_dst * (2 * fin_pad) * fout_pad
    bytes_accessed = (
        adj.size * adj.dtype.itemsize
        + h.size * h.dtype.itemsize * grid[0]          # H src slabs per row tile
        + n_dst * fin_pad * h.dtype.itemsize           # H dst tiles
        + w_stacked.size * w_stacked.dtype.itemsize
        + bias.size * bias.dtype.itemsize
        + n_dst * fout_pad * jnp.dtype(out_dtype).itemsize)

    kernel = functools.partial(_sage_layer_kernel, apply_relu=apply_relu)
    return pl.pallas_call(
        kernel,
        out_shape=jax.ShapeDtypeStruct((n_dst, fout_pad), out_dtype),
        grid_spec=pltpu.PrefetchScalarGridSpec(
            num_scalar_prefetch=0,
            grid=grid,
            in_specs=[
                pl.BlockSpec((tm, tk), lambda i, k: (i, k)),        # A tile
                pl.BlockSpec((tk, fin_pad), lambda i, k: (k, 0)),   # H (src slab)
                pl.BlockSpec((tm, fin_pad), lambda i, k: (i, 0)),   # H (dst rows)
                pl.BlockSpec(w_stacked.shape, lambda i, k: (0, 0)),  # resident
                pl.BlockSpec(bias.shape, lambda i, k: (0, 0)),       # resident
            ],
            out_specs=pl.BlockSpec((tm, fout_pad), lambda i, k: (i, 0)),
            scratch_shapes=[pltpu.VMEM((tm, fin_pad), jnp.float32)],
        ),
        compiler_params=pltpu.CompilerParams(
            dimension_semantics=("parallel", "arbitrary"),
            vmem_limit_bytes=32 * 1024 * 1024,
        ),
        cost_estimate=pl.CostEstimate(
            flops=flops, transcendentals=0, bytes_accessed=bytes_accessed),
    )(adj, h, h, w_stacked, bias)


def init_sage_params(key, in_feats, n_hidden, n_classes, n_layers):
    """Deterministic parameter init matching SAGE.__init__ layer shapes."""
    dims = []
    if n_layers == 1:
        dims.append((in_feats, n_classes))
    else:
        dims.append((in_feats, n_hidden))
        for _ in range(n_layers - 2):
            dims.append((n_hidden, n_hidden))
        dims.append((n_hidden, n_classes))

    params = []
    for (fin, fout) in dims:
        key, k1, k2 = jax.random.split(key, 3)
        scale = 1.0 / jnp.sqrt(jnp.float32(fin))
        w_self = jax.random.uniform(k1, (fin, fout), jnp.float32, -scale, scale)
        w_neigh = jax.random.uniform(k2, (fin, fout), jnp.float32, -scale, scale)
        bias = jnp.zeros((1, fout), jnp.float32)
        params.append((w_self, w_neigh, bias))
    return params


def pack_sage_params(params, compute_dtype=jnp.bfloat16):
    """Zero-pad feature dims to lane width (128) and stack [W_self; W_neigh]."""
    packed = []
    for (ws, wn, b) in params:
        fin, fout = ws.shape
        fin_pad = _round_up(fin, _LANE)
        fout_pad = _round_up(fout, _LANE)
        ws_p = jnp.zeros((fin_pad, fout_pad), jnp.float32).at[:fin, :fout].set(ws)
        wn_p = jnp.zeros((fin_pad, fout_pad), jnp.float32).at[:fin, :fout].set(wn)
        w_stacked = jnp.concatenate([ws_p, wn_p], axis=0).astype(compute_dtype)
        b_p = jnp.zeros((1, fout_pad), jnp.float32).at[:, :fout].set(b)
        packed.append((w_stacked, b_p))
    return packed


def sage_forward(adjs, x, params, *, compute_dtype=jnp.bfloat16, tm=128, tk=128):
    """Forward pass of SAGE: per-layer fused SAGEConv, relu between layers.

    adjs   : list of row-normalized dense adjacencies (one "block" per layer)
    x      : [N, in_feats] input features
    params : list of (w_self, w_neigh, bias) in original (unpadded) shapes
    """
    # TODO(synk): dropout is identity here (inference / eval mode); training-mode
    #             stochastic dropout would need pltpu.prng_* inside the kernel.
    n_layers = len(params)
    n_classes = params[-1][0].shape[1]
    packed = pack_sage_params(params, compute_dtype)

    n = x.shape[0]
    n_pad = _round_up(n, math.lcm(tm, tk))
    fin = x.shape[1]
    fin_pad = _round_up(fin, _LANE)

    h = jnp.zeros((n_pad, fin_pad), compute_dtype)
    h = h.at[:n, :fin].set(x.astype(compute_dtype))

    for l, (adj, (w_stacked, bias)) in enumerate(zip(adjs, packed)):
        nd, ns = adj.shape
        a = jnp.zeros((n_pad, n_pad), compute_dtype)
        a = a.at[:nd, :ns].set(adj.astype(compute_dtype))
        last = l == n_layers - 1
        h = sage_layer(a, h, w_stacked, bias,
                       apply_relu=not last,
                       out_dtype=jnp.float32 if last else compute_dtype,
                       tm=tm, tk=tk)
    return h[:n, :n_classes]


def sage_forward_ref(adjs, x, params, *, compute_dtype=jnp.bfloat16):
    """Plain-JAX reference with matching compute precision (bf16 in, f32 acc)."""
    n_layers = len(params)
    h = x.astype(compute_dtype)
    out = None
    for l, (adj, (ws, wn, b)) in enumerate(zip(adjs, params)):
        a = adj.astype(compute_dtype)
        h_neigh = jnp.dot(a, h, preferred_element_type=jnp.float32)
        out = (jnp.dot(h, ws.astype(compute_dtype),
                       preferred_element_type=jnp.float32)
               + jnp.dot(h_neigh.astype(compute_dtype), wn.astype(compute_dtype),
                         preferred_element_type=jnp.float32)
               + b)
        if l != n_layers - 1:
            out = jnp.maximum(out, 0.0)
            h = out.astype(compute_dtype)
    return out


def make_mean_adj(key, n):
    """Random directed graph with self-loops, rows normalized by in-degree
    (== DGL 'mean' aggregation as a dense matmul)."""
    a = (jax.random.uniform(key, (n, n)) < 0.1).astype(jnp.float32)
    a = a + jnp.eye(n, dtype=jnp.float32)  # self loop, also avoids zero degree
    a = jnp.minimum(a, 1.0)
    deg = jnp.sum(a, axis=1, keepdims=True)
    return a / jnp.maximum(deg, 1.0)


if __name__ == "__main__":
    key = jax.random.PRNGKey(0)

    # small shapes consistent with the module (N chosen to exercise a 2x2 grid)
    N = 256            # nodes per block (src == dst set)
    in_feats = 32
    n_hidden = 64
    n_classes = 8
    n_layers = 2

    k_x, k_a0, k_a1, k_p = jax.random.split(key, 4)
    x = jax.random.normal(k_x, (N, in_feats), jnp.float32)
    adjs = [make_mean_adj(k_a0, N), make_mean_adj(k_a1, N)]
    params = init_sage_params(k_p, in_feats, n_hidden, n_classes, n_layers)

    out = sage_forward(adjs, x, params)
    out = jax.block_until_ready(out)

    ref = sage_forward_ref(adjs, x, params)
    assert out.shape == (N, n_classes)
    max_err = float(jnp.max(jnp.abs(out - ref)))
    assert max_err < 2e-2, f"max abs err vs matched-precision reference: {max_err}"

    print("KERNEL_OK")
</pallas_src>

<mosaic_0001>
module attributes {stable_mosaic.version = 11 : i64} {
  func.func @_sage_layer_kernel(%arg0: i32, %arg1: i32, %arg2: memref<128x128xbf16, #tpu.memory_space<vmem>>, %arg3: memref<128x128xbf16, #tpu.memory_space<vmem>>, %arg4: memref<128x128xbf16, #tpu.memory_space<vmem>>, %arg5: memref<256x128xbf16, #tpu.memory_space<vmem>>, %arg6: memref<1x128xf32, #tpu.memory_space<vmem>>, %arg7: memref<128x128xbf16, #tpu.memory_space<vmem>>, %arg8: memref<128x128xf32, #tpu.memory_space<vmem>>) attributes {dimension_semantics = [#tpu.dimension_semantics<parallel>, #tpu.dimension_semantics<arbitrary>], iteration_bounds = array<i64: 2, 2>, scalar_prefetch = 0 : i64, scratch_operands = 1 : i64, tpu.core_type = #tpu.core_type<tc>, window_params = [{transform_indices = @transform_0, window_bounds = array<i64: 128, 128>}, {transform_indices = @transform_1, window_bounds = array<i64: 128, 128>}, {transform_indices = @transform_2, window_bounds = array<i64: 128, 128>}, {pipeline_mode = #tpu.pipeline_mode<synchronous>, transform_indices = @transform_3, window_bounds = array<i64: 256, 128>}, {pipeline_mode = #tpu.pipeline_mode<synchronous>, transform_indices = @transform_4, window_bounds = array<i64: 1, 128>}, {transform_indices = @transform_5, window_bounds = array<i64: 128, 128>}]} {
    %c0_i32 = arith.constant 0 : i32
    %0 = arith.cmpi eq, %arg1, %c0_i32 : i32
    %1 = arith.extui %0 : i1 to i32
    %c0_i32_0 = arith.constant 0 : i32
    %2 = arith.cmpi ne, %1, %c0_i32_0 : i32
    scf.if %2 {
      %cst_9 = arith.constant 0.000000e+00 : f32
      %12 = vector.broadcast %cst_9 : f32 to vector<128x128xf32>
      %c0_10 = arith.constant 0 : index
      %c0_11 = arith.constant 0 : index
      %13 = vector.load %arg8[%c0_10, %c0_11] : memref<128x128xf32, #tpu.memory_space<vmem>>, vector<128x128xf32>
      tpu.vector_store %arg8[%c0_10, %c0_11], %12 {strides = array<i32>} : memref<128x128xf32, #tpu.memory_space<vmem>>, vector<128x128xf32>,
    } else {
    }
    %c0 = arith.constant 0 : index
    %c0_1 = arith.constant 0 : index
    %3 = vector.load %arg8[%c0, %c0_1] : memref<128x128xf32, #tpu.memory_space<vmem>>, vector<128x128xf32>
    %c0_2 = arith.constant 0 : index
    %c0_3 = arith.constant 0 : index
    %4 = vector.load %arg2[%c0_2, %c0_3] : memref<128x128xbf16, #tpu.memory_space<vmem>>, vector<128x128xbf16>
    %c0_4 = arith.constant 0 : index
    %c0_5 = arith.constant 0 : index
    %5 = vector.load %arg3[%c0_4, %c0_5] : memref<128x128xbf16, #tpu.memory_space<vmem>>, vector<128x128xbf16>
    %cst = arith.constant dense<0.000000e+00> : vector<128x128xf32>
    %6 = tpu.matmul %4, %5, %cst {dimension_numbers = #tpu.dot_dimension_numbers<[1], [0], [0], [1], [0, 0, 1, 1], [], []>} : vector<128x128xbf16>, vector<128x128xbf16>, vector<128x128xf32> -> vector<128x128xf32>
    %7 = arith.addf %3, %6 : vector<128x128xf32>
    %c0_6 = arith.constant 0 : index
    %c0_7 = arith.constant 0 : index
    %8 = vector.load %arg8[%c0_6, %c0_7] : memref<128x128xf32, #tpu.memory_space<vmem>>, vector<128x128xf32>
    tpu.vector_store %arg8[%c0_6, %c0_7], %7 {strides = array<i32>} : memref<128x128xf32, #tpu.memory_space<vmem>>, vector<128x128xf32>,
    %c1_i32 = arith.constant 1 : i32
    %9 = arith.cmpi eq, %arg1, %c1_i32 : i32
    %10 = arith.extui %9 : i1 to i32
    %c0_i32_8 = arith.constant 0 : i32
    %11 = arith.cmpi ne, %10, %c0_i32_8 : i32
    scf.if %11 {
      %c0_9 = arith.constant 0 : index
      %c0_10 = arith.constant 0 : index
      %12 = vector.load %arg8[%c0_9, %c0_10] : memref<128x128xf32, #tpu.memory_space<vmem>>, vector<128x128xf32>
      %13 = arith.truncf %12 : vector<128x128xf32> to vector<128x128xbf16>
      %c0_11 = arith.constant 0 : index
      %c0_12 = arith.constant 0 : index
      %14 = vector.load %arg4[%c0_11, %c0_12] : memref<128x128xbf16, #tpu.memory_space<vmem>>, vector<128x128xbf16>
      %15 = tpu.concatenate %14, %13 in 1 : vector<128x128xbf16>, vector<128x128xbf16> -> vector<128x256xbf16>
      %c0_13 = arith.constant 0 : index
      %c0_14 = arith.constant 0 : index
      %16 = vector.load %arg5[%c0_13, %c0_14] : memref<256x128xbf16, #tpu.memory_space<vmem>>, vector<256x128xbf16>
      %cst_15 = arith.constant dense<0.000000e+00> : vector<128x128xf32>
      %17 = tpu.matmul %15, %16, %cst_15 {dimension_numbers = #tpu.dot_dimension_numbers<[1], [0], [0], [1], [0, 0, 1, 1], [], []>} : vector<128x256xbf16>, vector<256x128xbf16>, vector<128x128xf32> -> vector<128x128xf32>
      %c0_16 = arith.constant 0 : index
      %c0_17 = arith.constant 0 : index
      %18 = vector.load %arg6[%c0_16, %c0_17] : memref<1x128xf32, #tpu.memory_space<vmem>>, vector<1x128xf32>
      %19 = vector.broadcast %18 : vector<1x128xf32> to vector<128x128xf32>
      %20 = arith.addf %17, %19 : vector<128x128xf32>
      %cst_18 = arith.constant 0.000000e+00 : f32
      %21 = vector.broadcast %cst_18 : f32 to vector<128x128xf32>
      %22 = arith.maximumf %20, %21 : vector<128x128xf32>
      %23 = arith.truncf %22 : vector<128x128xf32> to vector<128x128xbf16>
      %c0_19 = arith.constant 0 : index
      %c0_20 = arith.constant 0 : index
      %24 = vector.load %arg7[%c0_19, %c0_20] : memref<128x128xbf16, #tpu.memory_space<vmem>>, vector<128x128xbf16>
      tpu.vector_store %arg7[%c0_19, %c0_20], %23 {strides = array<i32>} : memref<128x128xbf16, #tpu.memory_space<vmem>>, vector<128x128xbf16>,
    } else {
    }
    return
  }
  func.func @transform_0(%arg0: i32, %arg1: i32) -> (i32, i32) {
    %c0_i32 = arith.constant 0 : i32
    return %arg0, %arg1 : i32, i32
  }
  func.func @transform_1(%arg0: i32, %arg1: i32) -> (i32, i32) {
    %c0_i32 = arith.constant 0 : i32
    %c0_i32_0 = arith.constant 0 : i32
    return %arg1, %c0_i32 : i32, i32
  }
  func.func @transform_2(%arg0: i32, %arg1: i32) -> (i32, i32) {
    %c0_i32 = arith.constant 0 : i32
    %c0_i32_0 = arith.constant 0 : i32
    return %arg0, %c0_i32 : i32, i32
  }
  func.func @transform_3(%arg0: i32, %arg1: i32) -> (i32, i32) {
    %c0_i32 = arith.constant 0 : i32
    %c0_i32_0 = arith.constant 0 : i32
    %c0_i32_1 = arith.constant 0 : i32
    return %c0_i32, %c0_i32_0 : i32, i32
  }
  func.func @transform_4(%arg0: i32, %arg1: i32) -> (i32, i32) {
    %c0_i32 = arith.constant 0 : i32
    %c0_i32_0 = arith.constant 0 : i32
    %c0_i32_1 = arith.constant 0 : i32
    return %c0_i32, %c0_i32_0 : i32, i32
  }
  func.func @transform_5(%arg0: i32, %arg1: i32) -> (i32, i32) {
    %c0_i32 = arith.constant 0 : i32
    %c0_i32_0 = arith.constant 0 : i32
    return %arg0, %c0_i32 : i32, i32
  }
}

</mosaic_0001>

<llo_original>
// kernel: tpu_custom_call.1
$region0: #{tpu_custom_call.1}
  #allocation0 [shape = 'u32[]', space=smem, size = 0x4, offset = 0x4, fixed_abs, tag = 'smem constant byte address 0x4 - core index']
  #allocation1 [shape = 'u32[144,128]{1,0:T(1,128)}', space=vmem, size = 0x12000, scoped, tag = 'internal scratch']
  #allocation2 [shape = 'f32[128,128]{1,0:T(8,128)}', space=vmem, size = 0x10000, scoped, tag = 'scratch operand']
  %s0 = inlined_call_operand.hbm [shape: bf16[256,256], index: 0, kind: input, shape index: {}]
  %s1 = inlined_call_operand.hbm [shape: bf16[256,128], index: 1, kind: input, shape index: {}]
  %s2 = inlined_call_operand.hbm [shape: bf16[256,128], index: 2, kind: input, shape index: {}]
  %s3 = inlined_call_operand.hbm [shape: bf16[256,128], index: 3, kind: input, shape index: {}]
  %s4 = inlined_call_operand.vmem [shape: f32[1,128], index: 4, kind: input, shape index: {}]
  %s5 = inlined_call_operand.hbm [shape: bf16[256,128], index: 5, kind: output, shape index: {}]
  %s6 = sld [smem:[#allocation0]]
  $region77: #{tpu_custom_call.1} parent=0
    _
  %s8 = ssub.s32 1, %s6
  %s9 = scalar_select 0, %s8, %s6
  $region1: #{tpu_custom_call.1} parent=0
    #allocation3 [shape = 'u8[65536]{0}', space=vmem, size = 0x10000, scoped, tag = 'input window, operand 0']
    #allocation4 [shape = 's32[2]{0}', space=sflag, size = 0x8, scoped, tag = 'scoped memory for tpu_custom_call.1']
    #allocation5 [shape = 's32[2]{0}', space=sflag, size = 0x8, scoped, tag = 'scoped memory for tpu_custom_call.1']
    #allocation6 [shape = 'u8[65536]{0}', space=vmem, size = 0x10000, scoped, tag = 'input window, operand 1']
    #allocation7 [shape = 's32[2]{0}', space=sflag, size = 0x8, scoped, tag = 'scoped memory for tpu_custom_call.1']
    #allocation8 [shape = 'u8[65536]{0}', space=vmem, size = 0x10000, scoped, tag = 'input window, operand 2']
    #allocation9 [shape = 'u8[65536]{0}', space=vmem, size = 0x10000, scoped, tag = 'input window, operand 3, single buffered']
    #allocation10 [shape = 's32[1]{0}', space=sflag, size = 0x4, scoped, tag = 'scoped memory for tpu_custom_call.1']
    #allocation11 [shape = 'u8[65536]{0}', space=vmem, size = 0x10000, scoped, tag = 'output window, operand 0']
    %10 = vsyncpa [#allocation4], 0
    %s11 = scalar_lea.sflag [#allocation4], 1
    %12 = vsyncpa %s11, 0
    %13 = vsyncpa [#allocation7], 0
    %s14 = scalar_lea.sflag [#allocation7], 1
    %15 = vsyncpa %s14, 0
    %16 = vsyncpa [#allocation10], 0
    %17 = vsyncpa [#allocation5], 0
    %s18 = scalar_lea.sflag [#allocation5], 1
    %19 = vsyncpa %s18, 0
    loop: start=0, step=1, limit=6
    $region2: #{tpu_custom_call.1} parent=1 // loop_pre_header
      _
    $region3: #{tpu_custom_call.1} parent=1 // loop_header
      %s21 = sphi 0, %s25
      %p22 = scmp.ge.s32.totalorder %s21, 6
      %s28 = sphi 0, %s40
      %s29 = sphi 0, %s36
      %s30 = sphi 0, %s28
      %s31 = sphi 0, %s29
      %s32 = sphi 0, %s30
      %s33 = sphi 0, %s31
      %s45 = sphi 0, %s47
      %s48 = sphi 0, %s45
      %s49 = sphi 0, %s48
      %s65 = sphi 0, %s49
      %s71 = sphi 0, %s73
      %s74 = sphi 0, %s71
      %s75 = sphi 0, %s74
      %s91 = sphi 0, %s75
      %s97 = sphi 0, %s99
      %s100 = sphi 0, %s97
      %s101 = sphi 0, %s100
      %s117 = sphi 0, %s101
      %s121 = sphi 0, %s121
      %s123 = sphi 0, %s121
      %s124 = sphi 0, %s123
      %s138 = sphi 0, %s124
      %s142 = sphi 0, %s142
      %s144 = sphi 0, %s142
      %s145 = sphi 0, %s144
      %s159 = sphi 0, %s145
      %s165 = sphi 0, %s167
      %s168 = sphi 0, %s165
      %s169 = sphi 0, %s168
      %s185 = sphi 0, %s169
    $region4: #{tpu_custom_call.1} parent=1 // loop_header_branch
      %24 = sbr.rel (%p22) target = $region8
    $region5: #{tpu_custom_call.1} parent=1 // loop_body
      %s26 = ssub.s32 %s21, 1
      %s27 = ssub.s32 %s21, 2
      %s34 = sadd.s32 1, %s29
      %p35 = scmp.ge.s32.totalorder %s34, 2
      %s36 = scalar_select %p35, 0, %s34
      %s37 = sadd.s32 1, %s28
      %s38 = scalar_select %p35, %s37, %s28
      %p39 = scmp.ge.s32.totalorder %s38, 2
      %s40 = scalar_select %p39, 0, %s38
      %s41 = ssub.s32 %s28, %s40
      %s42 = ssub.s32 %s29, %s36
      %s43 = sor.u32 %s41, %s42
      %p44 = scmp.eq.s32.totalorder %s43, 0
      %s46 = sadd.s32 %s45, 1
      %s47 = scalar_select %p44, %s45, %s46
      %p50 = pneg %p44
      %p51 = scmp.eq.s32.totalorder %s21, 3
      %p52 = por %p50, %p51
      %p53 = scmp.ne.s32.totalorder %s45, %s48
      %p54 = scmp.eq.s32.totalorder %s21, 0
      %p55 = por %p53, %p54
      %p56 = scmp.ne.s32.totalorder %s45, %s48
      %p57 = scmp.eq.s32.totalorder %s26, 3
      %p58 = por %p56, %p57
      %p59 = scmp.ne.s32.totalorder %s48, %s49
      %p60 = scmp.eq.s32.totalorder %s26, 0
      %p61 = por %p59, %p60
      %p62 = scmp.ne.s32.totalorder %s48, %s49
      %p63 = scmp.eq.s32.totalorder %s27, 3
      %p64 = por %p62, %p63
      %p66 = scmp.ne.s32.totalorder %s49, %s65
      %p67 = scmp.eq.s32.totalorder %s27, 0
      %p68 = por %p66, %p67
      %s69 = ssub.s32 %s29, %s36
      %p70 = scmp.eq.s32.totalorder %s69, 0
      %s72 = sadd.s32 %s71, 1
      %s73 = scalar_select %p70, %s71, %s72
      %p76 = pneg %p70
      %p77 = scmp.eq.s32.totalorder %s21, 3
      %p78 = por %p76, %p77
      %p79 = scmp.ne.s32.totalorder %s71, %s74
      %p80 = scmp.eq.s32.totalorder %s21, 0
      %p81 = por %p79, %p80
      %p82 = scmp.ne.s32.totalorder %s71, %s74
      %p83 = scmp.eq.s32.totalorder %s26, 3
      %p84 = por %p82, %p83
      %p85 = scmp.ne.s32.totalorder %s74, %s75
      %p86 = scmp.eq.s32.totalorder %s26, 0
      %p87 = por %p85, %p86
      %p88 = scmp.ne.s32.totalorder %s74, %s75
      %p89 = scmp.eq.s32.totalorder %s27, 3
      %p90 = por %p88, %p89
      %p92 = scmp.ne.s32.totalorder %s75, %s91
      %p93 = scmp.eq.s32.totalorder %s27, 0
      %p94 = por %p92, %p93
      %s95 = ssub.s32 %s28, %s40
      %p96 = scmp.eq.s32.totalorder %s95, 0
      %s98 = sadd.s32 %s97, 1
      %s99 = scalar_select %p96, %s97, %s98
      %p102 = pneg %p96
      %p103 = scmp.eq.s32.totalorder %s21, 3
      %p104 = por %p102, %p103
      %p105 = scmp.ne.s32.totalorder %s97, %s100
      %p106 = scmp.eq.s32.totalorder %s21, 0
      %p107 = por %p105, %p106
      %p108 = scmp.ne.s32.totalorder %s97, %s100
      %p109 = scmp.eq.s32.totalorder %s26, 3
      %p110 = por %p108, %p109
      %p111 = scmp.ne.s32.totalorder %s100, %s101
      %p112 = scmp.eq.s32.totalorder %s26, 0
      %p113 = por %p111, %p112
      %p114 = scmp.ne.s32.totalorder %s100, %s101
      %p115 = scmp.eq.s32.totalorder %s27, 3
      %p116 = por %p114, %p115
      %p118 = scmp.ne.s32.totalorder %s101, %s117
      %p119 = scmp.eq.s32.totalorder %s27, 0
      %p120 = por %p118, %p119
      %s122 = sadd.s32 %s121, 1
      %p125 = scmp.eq.s32.totalorder %s21, 3
      %p126 = scmp.ne.s32.totalorder %s121, %s123
      %p127 = scmp.eq.s32.totalorder %s21, 0
      %p128 = por %p126, %p127
      %p129 = scmp.ne.s32.totalorder %s121, %s123
      %p130 = scmp.eq.s32.totalorder %s26, 3
      %p131 = por %p129, %p130
      %p132 = scmp.ne.s32.totalorder %s123, %s124
      %p133 = scmp.eq.s32.totalorder %s26, 0
      %p134 = por %p132, %p133
      %p135 = scmp.ne.s32.totalorder %s123, %s124
      %p136 = scmp.eq.s32.totalorder %s27, 3
      %p137 = por %p135, %p136
      %p139 = scmp.ne.s32.totalorder %s124, %s138
      %p140 = scmp.eq.s32.totalorder %s27, 0
      %p141 = por %p139, %p140
      %s143 = sadd.s32 %s142, 1
      %p146 = scmp.eq.s32.totalorder %s21, 3
      %p147 = scmp.ne.s32.totalorder %s142, %s144
      %p148 = scmp.eq.s32.totalorder %s21, 0
      %p149 = por %p147, %p148
      %p150 = scmp.ne.s32.totalorder %s142, %s144
      %p151 = scmp.eq.s32.totalorder %s26, 3
      %p152 = por %p150, %p151
      %p153 = scmp.ne.s32.totalorder %s144, %s145
      %p154 = scmp.eq.s32.totalorder %s26, 0
      %p155 = por %p153, %p154
      %p156 = scmp.ne.s32.totalorder %s144, %s145
      %p157 = scmp.eq.s32.totalorder %s27, 3
      %p158 = por %p156, %p157
      %p160 = scmp.ne.s32.totalorder %s145, %s159
      %p161 = scmp.eq.s32.totalorder %s27, 0
      %p162 = por %p160, %p161
      %s163 = ssub.s32 %s28, %s40
      %p164 = scmp.eq.s32.totalorder %s163, 0
      %s166 = sadd.s32 %s165, 1
      %s167 = scalar_select %p164, %s165, %s166
      %p170 = pneg %p164
      %p171 = scmp.eq.s32.totalorder %s21, 3
      %p172 = por %p170, %p171
      %p173 = scmp.ne.s32.totalorder %s165, %s168
      %p174 = scmp.eq.s32.totalorder %s21, 0
      %p175 = por %p173, %p174
      %p176 = scmp.ne.s32.totalorder %s165, %s168
      %p177 = scmp.eq.s32.totalorder %s26, 3
      %p178 = por %p176, %p177
      %p179 = scmp.ne.s32.totalorder %s168, %s169
      %p180 = scmp.eq.s32.totalorder %s26, 0
      %p181 = por %p179, %p180
      %p182 = scmp.ne.s32.totalorder %s168, %s169
      %p183 = scmp.eq.s32.totalorder %s27, 3
      %p184 = por %p182, %p183
      %p186 = scmp.ne.s32.totalorder %s169, %s185
      %p187 = scmp.eq.s32.totalorder %s27, 0
      %p188 = por %p186, %p187
      %p189 = scmp.le.s32.totalorder 1, %s21
      %p190 = scmp.lt.s32.totalorder %s21, 5
      %p191 = pnand %p189, %p190
      %p192 = pneg %p191
      // Predicated region
      $region9: #{tpu_custom_call.1} parent=5 // pred_check
        _
      $region10: #{tpu_custom_call.1} parent=5 // pred_check_branch
        %194 = sbr.rel (%p191) target = $region12
      $region11: #{tpu_custom_call.1} parent=5 // pred_region
        %s195 = ssub.s32 %s21, 1
        // Predicated region
        $region13: #{tpu_custom_call.1} parent=11 // pred_check
          %p196 = pneg %p134
        $region14: #{tpu_custom_call.1} parent=11 // pred_check_branch
          %198 = sbr.rel (%p196) target = $region16
        $region15: #{tpu_custom_call.1} parent=11 // pred_region
          %s200 = ssub.s32 2048, 2048
          %201 = vsyncadd [#allocation10], %s200
          %s202 = sshll.u32 [#allocation9], 4
          %s203 = int_to_ptr.vmem [resolvable:$true] %s202
          %208 = dma.hbm_to_vmem [thread:$0]  %s3, 2048, %s203, [#allocation10], 64, 64, 4
        $region16: #{tpu_custom_call.1} parent=11 // pred_fallthru
          _
        // Predicated region
        $region17: #{tpu_custom_call.1} parent=11 // pred_check
          %p209 = pneg %p155
        $region18: #{tpu_custom_call.1} parent=11 // pred_check_branch
          %211 = sbr.rel (%p209) target = $region20
        $region19: #{tpu_custom_call.1} parent=11 // pred_region
          _
        $region20: #{tpu_custom_call.1} parent=11 // pred_fallthru
          _
      $region12: #{tpu_custom_call.1} parent=5 // pred_fallthru
        _
      %p212 = scmp.lt.s32.totalorder %s21, 4
      // Predicated region
      $region21: #{tpu_custom_call.1} parent=5 // pred_check
        %p213 = pneg %p212
      $region22: #{tpu_custom_call.1} parent=5 // pred_check_branch
        %215 = sbr.rel (%p213) target = $region24
      $region23: #{tpu_custom_call.1} parent=5 // pred_region
        // Predicated region
        $region25: #{tpu_custom_call.1} parent=23 // pred_check
          %p216 = pneg %p55
        $region26: #{tpu_custom_call.1} parent=23 // pred_check_branch
          %218 = sbr.rel (%p216) target = $region28
        $region27: #{tpu_custom_call.1} parent=23 // pred_region
          %s219 = sand.u32 %s45, 1
          %s220 = scalar_lea.sflag [#allocation4], %s219
          %s221 = sand.u32 %s45, 1
          %s222 = smul.addr %s221, 64
          %s223 = scalar_lea.vmem [#allocation3], %s222
          %s224 = smul.u32 16, %s28
          %s226 = ssub.s32 1024, 1024
          %227 = vsyncadd %s220, %s226
          %s228 = smul.addr %s224, 2
          %s229 = sadd.s32 %s29, %s228
          %s230 = smul.addr %s229, 64
          %s231 = scalar_lea.hbm %s0, %s230
          %s232 = sshll.u32 %s223, 4
          %s233 = int_to_ptr.vmem [resolvable:$true] %s232
          %238 = dma.hbm_to_vmem [thread:$0]  %s231, 1024, %s233, %s220, 128, 64, 4
        $region28: #{tpu_custom_call.1} parent=23 // pred_fallthru
          _
        // Predicated region
        $region29: #{tpu_custom_call.1} parent=23 // pred_check
          %p239 = pneg %p81
        $region30: #{tpu_custom_call.1} parent=23 // pred_check_branch
          %241 = sbr.rel (%p239) target = $region32
        $region31: #{tpu_custom_call.1} parent=23 // pred_region
          %s242 = sand.u32 %s21, 1
          %s243 = scalar_lea.sflag [#allocation7], %s242
          %s244 = sand.u32 %s71, 1
          %s245 = smul.addr %s244, 64
          %s246 = scalar_lea.vmem [#allocation6], %s245
          %s247 = smul.u32 16, %s29
          %s249 = ssub.s32 1024, 1024
          %250 = vsyncadd %s243, %s249
          %s251 = smul.addr %s247, 64
          %s252 = scalar_lea.hbm %s1, %s251
          %s253 = sshll.u32 %s246, 4
          %s254 = int_to_ptr.vmem [resolvable:$true] %s253
          %259 = dma.hbm_to_vmem [thread:$0]  %s252, 1024, %s254, %s243, 64, 64, 4
        $region32: #{tpu_custom_call.1} parent=23 // pred_fallthru
          _
        // Predicated region
        $region33: #{tpu_custom_call.1} parent=23 // pred_check
          %p260 = pneg %p107
        $region34: #{tpu_custom_call.1} parent=23 // pred_check_branch
          %262 = sbr.rel (%p260) target = $region36
        $region35: #{tpu_custom_call.1} parent=23 // pred_region
          %s263 = sand.u32 %s21, 1
          %s264 = scalar_lea.sflag [#allocation7], %s263
          %s265 = sand.u32 %s97, 1
          %s266 = smul.addr %s265, 64
          %s267 = scalar_lea.vmem [#allocation8], %s266
          %s268 = smul.u32 16, %s28
          %s270 = ssub.s32 1024, 1024
          %271 = vsyncadd %s264, %s270
          %s272 = smul.addr %s268, 64
          %s273 = scalar_lea.hbm %s2, %s272
          %s274 = sshll.u32 %s267, 4
          %s275 = int_to_ptr.vmem [resolvable:$true] %s274
          %280 = dma.hbm_to_vmem [thread:$0]  %s273, 1024, %s275, %s264, 64, 64, 4
        $region36: #{tpu_custom_call.1} parent=23 // pred_fallthru
          _
      $region24: #{tpu_custom_call.1} parent=5 // pred_fallthru
        _
      %p281 = scmp.le.s32.totalorder 1, %s21
      %p282 = scmp.lt.s32.totalorder %s21, 5
      %p283 = pnand %p281, %p282
      %p284 = pneg %p283
      // Predicated region
      $region37: #{tpu_custom_call.1} parent=5 // pred_check
        _
      $region38: #{tpu_custom_call.1} parent=5 // pred_check_branch
        %286 = sbr.rel (%p283) target = $region40
      $region39: #{tpu_custom_call.1} parent=5 // pred_region
        %s287 = ssub.s32 %s21, 1
        %s288 = sand.u32 %s48, 1
        %s289 = scalar_lea.sflag [#allocation4], %s288
        %s290 = sand.u32 %s48, 1
        %s291 = smul.addr %s290, 64
        %s292 = scalar_lea.vmem [#allocation3], %s291
        // Predicated region
        $region41: #{tpu_custom_call.1} parent=39 // pred_check
          %p293 = pneg %p61
        $region42: #{tpu_custom_call.1} parent=39 // pred_check_branch
          %295 = sbr.rel (%p293) target = $region44
        $region43: #{tpu_custom_call.1} parent=39 // pred_region
          %296 = dma.done %s289, 1024
        $region44: #{tpu_custom_call.1} parent=39 // pred_fallthru
          _
        %s297 = sand.u32 %s26, 1
        %s298 = scalar_lea.sflag [#allocation7], %s297
        %s299 = sand.u32 %s74, 1
        %s300 = smul.addr %s299, 64
        %s301 = scalar_lea.vmem [#allocation6], %s300
        // Predicated region
        $region45: #{tpu_custom_call.1} parent=39 // pred_check
          %p302 = pneg %p87
        $region46: #{tpu_custom_call.1} parent=39 // pred_check_branch
          %304 = sbr.rel (%p302) target = $region48
        $region47: #{tpu_custom_call.1} parent=39 // pred_region
          %305 = dma.done %s298, 1024
        $region48: #{tpu_custom_call.1} parent=39 // pred_fallthru
          _
        %s306 = sand.u32 %s26, 1
        %s307 = scalar_lea.sflag [#allocation7], %s306
        %s308 = sand.u32 %s100, 1
        %s309 = smul.addr %s308, 64
        %s310 = scalar_lea.vmem [#allocation8], %s309
        // Predicated region
        $region49: #{tpu_custom_call.1} parent=39 // pred_check
          %p311 = pneg %p113
        $region50: #{tpu_custom_call.1} parent=39 // pred_check_branch
          %313 = sbr.rel (%p311) target = $region52
        $region51: #{tpu_custom_call.1} parent=39 // pred_region
          %314 = dma.done %s307, 1024
        $region52: #{tpu_custom_call.1} parent=39 // pred_fallthru
          _
        // Predicated region
        $region53: #{tpu_custom_call.1} parent=39 // pred_check
          %p315 = pneg %p134
        $region54: #{tpu_custom_call.1} parent=39 // pred_check_branch
          %317 = sbr.rel (%p315) target = $region56
        $region55: #{tpu_custom_call.1} parent=39 // pred_region
          %318 = dma.done [#allocation10], 2048
        $region56: #{tpu_custom_call.1} parent=39 // pred_fallthru
          _
        %s319 = sand.u32 %s48, 1
        %s320 = scalar_lea.sflag [#allocation4], %s319
        %s321 = sand.u32 %s48, 1
        %s322 = smul.addr %s321, 64
        %s323 = scalar_lea.vmem [#allocation3], %s322
        %p324 = pneg %p61
        %p325 = pneg %p58
        %s326 = sand.u32 %s26, 1
        %s327 = scalar_lea.sflag [#allocation7], %s326
        %s328 = sand.u32 %s74, 1
        %s329 = smul.addr %s328, 64
        %s330 = scalar_lea.vmem [#allocation6], %s329
        %p331 = pneg %p87
        %p332 = pneg %p84
        %s333 = sand.u32 %s26, 1
        %s334 = scalar_lea.sflag [#allocation7], %s333
        %s335 = sand.u32 %s100, 1
        %s336 = smul.addr %s335, 64
        %s337 = scalar_lea.vmem [#allocation8], %s336
        %p338 = pneg %p113
        %p339 = pneg %p110
        %p340 = pneg %p134
        %p341 = pneg %p131
        %p342 = pneg %p155
        %p343 = pneg %p152
        %p344 = pneg %p181
        %p345 = pneg %p178
        %s346 = sand.u32 %s168, 1
        %s347 = scalar_lea.sflag [#allocation5], %s346
        %s348 = sand.u32 %s168, 1
        %s349 = smul.addr %s348, 64
        %s350 = scalar_lea.vmem [#allocation11], %s349
        %s351 = smul.u32 16, %s30
        %s352 = smul.u32 16, %s31
        %s353 = smul.u32 16, %s30
        %s354 = smul.u32 16, %s30
        %p356 = scmp.eq.s32.totalorder %s31, 0
        // Predicated region
        $region57: #{tpu_custom_call.1} parent=39 // pred_check
          %p357 = pneg %p356
        $region58: #{tpu_custom_call.1} parent=39 // pred_check_branch
          %359 = sbr.rel (%p357) target = $region60
        $region59: #{tpu_custom_call.1} parent=39 // pred_region
          %360 = vst [vmem:[#allocation2] sm:$0xff] 0.0
          %361 = vst [vmem:[#allocation2 + $0x8] sm:$0xff] 0.0
          %362 = vst [vmem:[#allocation2 + $0x10] sm:$0xff] 0.0
          %363 = vst [vmem:[#allocation2 + $0x18] sm:$0xff] 0.0
          %364 = vst [vmem:[#allocation2 + $0x20] sm:$0xff] 0.0
          %365 = vst [vmem:[#allocation2 + $0x28] sm:$0xff] 0.0
          %366 = vst [vmem:[#allocation2 + $0x30] sm:$0xff] 0.0
          %367 = vst [vmem:[#allocation2 + $0x38] sm:$0xff] 0.0
          %368 = vst [vmem:[#allocation2 + $0x40] sm:$0xff] 0.0
          %369 = vst [vmem:[#allocation2 + $0x48] sm:$0xff] 0.0
          %370 = vst [vmem:[#allocation2 + $0x50] sm:$0xff] 0.0
          %371 = vst [vmem:[#allocation2 + $0x58] sm:$0xff] 0.0
          %372 = vst [vmem:[#allocation2 + $0x60] sm:$0xff] 0.0
          %373 = vst [vmem:[#allocation2 + $0x68] sm:$0xff] 0.0
          %374 = vst [vmem:[#allocation2 + $0x70] sm:$0xff] 0.0
          %375 = vst [vmem:[#allocation2 + $0x78] sm:$0xff] 0.0
        $region60: #{tpu_custom_call.1} parent=39 // pred_fallthru
          _
        %v376 = vld [vmem:[#allocation2] sm:$0xff]
        %v377 = vld [vmem:[#allocation2 + $0x8] sm:$0xff]
        %v378 = vld [vmem:[#allocation2 + $0x10] sm:$0xff]
        %v379 = vld [vmem:[#allocation2 + $0x18] sm:$0xff]
        %v380 = vld [vmem:[#allocation2 + $0x20] sm:$0xff]
        %v381 = vld [vmem:[#allocation2 + $0x28] sm:$0xff]
        %v382 = vld [vmem:[#allocation2 + $0x30] sm:$0xff]
        %v383 = vld [vmem:[#allocation2 + $0x38] sm:$0xff]
        %v384 = vld [vmem:[#allocation2 + $0x40] sm:$0xff]
        %v385 = vld [vmem:[#allocation2 + $0x48] sm:$0xff]
        %v386 = vld [vmem:[#allocation2 + $0x50] sm:$0xff]
        %v387 = vld [vmem:[#allocation2 + $0x58] sm:$0xff]
        %v388 = vld [vmem:[#allocation2 + $0x60] sm:$0xff]
        %v389 = vld [vmem:[#allocation2 + $0x68] sm:$0xff]
        %v390 = vld [vmem:[#allocation2 + $0x70] sm:$0xff]
        %v391 = vld [vmem:[#allocation2 + $0x78] sm:$0xff]
        %v392 = vld [vmem:[%s292] sm:$0xf]
        %v393 = vld [vmem:[%s292 + $0x4] sm:$0xf]
        %v394 = vld [vmem:[%s292 + $0x8] sm:$0xf]
        %v395 = vld [vmem:[%s292 + $0xc] sm:$0xf]
        %v396 = vld [vmem:[%s292 + $0x10] sm:$0xf]
        %v397 = vld [vmem:[%s292 + $0x14] sm:$0xf]
        %v398 = vld [vmem:[%s292 + $0x18] sm:$0xf]
        %v399 = vld [vmem:[%s292 + $0x1c] sm:$0xf]
        %v400 = vld [vmem:[%s292 + $0x20] sm:$0xf]
        %v401 = vld [vmem:[%s292 + $0x24] sm:$0xf]
        %v402 = vld [vmem:[%s292 + $0x28] sm:$0xf]
        %v403 = vld [vmem:[%s292 + $0x2c] sm:$0xf]
        %v404 = vld [vmem:[%s292 + $0x30] sm:$0xf]
        %v405 = vld [vmem:[%s292 + $0x34] sm:$0xf]
        %v406 = vld [vmem:[%s292 + $0x38] sm:$0xf]
        %v407 = vld [vmem:[%s292 + $0x3c] sm:$0xf]
        %v408 = vld [vmem:[%s301] sm:$0xf]
        %v409 = vld [vmem:[%s301 + $0x4] sm:$0xf]
        %v410 = vld [vmem:[%s301 + $0x8] sm:$0xf]
        %v411 = vld [vmem:[%s301 + $0xc] sm:$0xf]
        %v412 = vld [vmem:[%s301 + $0x10] sm:$0xf]
        %v413 = vld [vmem:[%s301 + $0x14] sm:$0xf]
        %v414 = vld [vmem:[%s301 + $0x18] sm:$0xf]
        %v415 = vld [vmem:[%s301 + $0x1c] sm:$0xf]
        %v416 = vld [vmem:[%s301 + $0x20] sm:$0xf]
        %v417 = vld [vmem:[%s301 + $0x24] sm:$0xf]
        %v418 = vld [vmem:[%s301 + $0x28] sm:$0xf]
        %v419 = vld [vmem:[%s301 + $0x2c] sm:$0xf]
        %v420 = vld [vmem:[%s301 + $0x30] sm:$0xf]
        %v421 = vld [vmem:[%s301 + $0x34] sm:$0xf]
        %v422 = vld [vmem:[%s301 + $0x38] sm:$0xf]
        %v423 = vld [vmem:[%s301 + $0x3c] sm:$0xf]
        %v440 = vunpack.c.l.b16 %v392
        %v441 = vunpack.c.l.b16 %v393
        %v442 = vunpack.c.l.b16 %v394
        %v443 = vunpack.c.l.b16 %v395
        %v444 = vunpack.c.l.b16 %v396
        %v445 = vunpack.c.l.b16 %v397
        %v446 = vunpack.c.l.b16 %v398
        %v447 = vunpack.c.l.b16 %v399
        %v448 = vunpack.c.l.b16 %v400
        %v449 = vunpack.c.l.b16 %v401
        %v450 = vunpack.c.l.b16 %v402
        %v451 = vunpack.c.l.b16 %v403
        %v452 = vunpack.c.l.b16 %v404
        %v453 = vunpack.c.l.b16 %v405
        %v454 = vunpack.c.l.b16 %v406
        %v455 = vunpack.c.l.b16 %v407
        %v456 = vpack.c.b16 %v441, %v440
        %v457 = vpack.c.b16 %v443, %v442
        %v458 = vpack.c.b16 %v445, %v444
        %v459 = vpack.c.b16 %v447, %v446
        %v460 = vpack.c.b16 %v449, %v448
        %v461 = vpack.c.b16 %v451, %v450
        %v462 = vpack.c.b16 %v453, %v452
        %v463 = vpack.c.b16 %v455, %v454
        %v488 = vunpack.c.l.b16 %v408
        %v489 = vunpack.c.l.b16 %v409
        %v490 = vunpack.c.l.b16 %v410
        %v491 = vunpack.c.l.b16 %v411
        %v492 = vunpack.c.l.b16 %v412
        %v493 = vunpack.c.l.b16 %v413
        %v494 = vunpack.c.l.b16 %v414
        %v495 = vunpack.c.l.b16 %v415
        %v496 = vunpack.c.l.b16 %v416
        %v497 = vunpack.c.l.b16 %v417
        %v498 = vunpack.c.l.b16 %v418
        %v499 = vunpack.c.l.b16 %v419
        %v500 = vunpack.c.l.b16 %v420
        %v501 = vunpack.c.l.b16 %v421
        %v502 = vunpack.c.l.b16 %v422
        %v503 = vunpack.c.l.b16 %v423
        %v504 = vpack.c.b16 %v489, %v488
        %v505 = vpack.c.b16 %v491, %v490
        %v506 = vpack.c.b16 %v493, %v492
        %v507 = vpack.c.b16 %v495, %v494
        %v508 = vpack.c.b16 %v497, %v496
        %v509 = vpack.c.b16 %v499, %v498
        %v510 = vpack.c.b16 %v501, %v500
        %v511 = vpack.c.b16 %v503, %v502
        %520 = vmatprep.subr.bf16.mxu0 0
        %521 = vmatpush1.bf16.msra.mxu0 %v504
        %522 = vmatprep.subr.bf16.mxu0 0
        %523 = vmatpush1.bf16.msra.mxu0 %v505
        %524 = vmatprep.subr.bf16.mxu0 0
        %525 = vmatpush1.bf16.msra.mxu0 %v506
        %526 = vmatprep.subr.bf16.mxu0 0
        %527 = vmatpush1.bf16.msra.mxu0 %v507
        %528 = vmatprep.subr.bf16.mxu0 0
        %529 = vmatpush1.bf16.msra.mxu0 %v508
        %530 = vmatprep.subr.bf16.mxu0 0
        %531 = vmatpush1.bf16.msra.mxu0 %v509
        %532 = vmatprep.subr.bf16.mxu0 0
        %533 = vmatpush1.bf16.msra.mxu0 %v510
        %534 = vmatprep.subr.bf16.mxu0 0
        %535 = vmatpush1.bf16.msra.mxu0 %v511
        %536 = vmatprep.subr.bf16.mxu0 0
        %537 = vmatpush1.bf16.msra.mxu0 0
        %538 = vmatprep.subr.bf16.mxu0 0
        %539 = vmatpush1.bf16.msra.mxu0 0
        %540 = vmatprep.subr.bf16.mxu0 0
        %541 = vmatpush1.bf16.msra.mxu0 0
        %542 = vmatprep.subr.bf16.mxu0 0
        %543 = vmatpush1.bf16.msra.mxu0 0
        %544 = vmatprep.subr.bf16.mxu0 0
        %545 = vmatpush1.bf16.msra.mxu0 0
        %546 = vmatprep.subr.bf16.mxu0 0
        %547 = vmatpush1.bf16.msra.mxu0 0
        %548 = vmatprep.subr.bf16.mxu0 0
        %549 = vmatpush1.bf16.msra.mxu0 0
        %550 = vmatprep.subr.bf16.mxu0 0
        %551 = vmatpush1.bf16.msra.mxu0 0
        %552 = vmatprep.mubr.bf16.mxu0 0
        %553 = vmatmul.mubr.bf16.gmra.mrb[0].mxu0 %v456
        %v554 = vpop.f32.mrb[0].mxu0
        %v555 = vadd.f32 0.0, %v554
        %v556 = vpop.f32.mrb[0].mxu0
        %v557 = vpop.f32.mrb[0].mxu0
        %v558 = vadd.f32 0.0, %v557
        %v559 = vpop.f32.mrb[0].mxu0
        %560 = vmatprep.mubr.bf16.mxu0 0
        %561 = vmatmul.mubr.bf16.gmra.mrb[0].mxu0 %v457
        %v562 = vpop.f32.mrb[0].mxu0
        %v563 = vadd.f32 0.0, %v562
        %v564 = vpop.f32.mrb[0].mxu0
        %v565 = vpop.f32.mrb[0].mxu0
        %v566 = vadd.f32 0.0, %v565
        %v567 = vpop.f32.mrb[0].mxu0
        %568 = vmatprep.mubr.bf16.mxu0 0
        %569 = vmatmul.mubr.bf16.gmra.mrb[0].mxu0 %v458
        %v570 = vpop.f32.mrb[0].mxu0
        %v571 = vadd.f32 0.0, %v570
        %v572 = vpop.f32.mrb[0].mxu0
        %v573 = vpop.f32.mrb[0].mxu0
        %v574 = vadd.f32 0.0, %v573
        %v575 = vpop.f32.mrb[0].mxu0
        %576 = vmatprep.mubr.bf16.mxu0 0
        %577 = vmatmul.mubr.bf16.gmra.mrb[0].mxu0 %v459
        %v578 = vpop.f32.mrb[0].mxu0
        %v579 = vadd.f32 0.0, %v578
        %v580 = vpop.f32.mrb[0].mxu0
        %v581 = vpop.f32.mrb[0].mxu0
        %v582 = vadd.f32 0.0, %v581
        %v583 = vpop.f32.mrb[0].mxu0
        %584 = vmatprep.mubr.bf16.mxu0 0
        %585 = vmatmul.mubr.bf16.gmra.mrb[0].mxu0 %v460
        %v586 = vpop.f32.mrb[0].mxu0
        %v587 = vadd.f32 0.0, %v586
        %v588 = vpop.f32.mrb[0].mxu0
        %v589 = vpop.f32.mrb[0].mxu0
        %v590 = vadd.f32 0.0, %v589
        %v591 = vpop.f32.mrb[0].mxu0
        %592 = vmatprep.mubr.bf16.mxu0 0
        %593 = vmatmul.mubr.bf16.gmra.mrb[0].mxu0 %v461
        %v594 = vpop.f32.mrb[0].mxu0
        %v595 = vadd.f32 0.0, %v594
        %v596 = vpop.f32.mrb[0].mxu0
        %v597 = vpop.f32.mrb[0].mxu0
        %v598 = vadd.f32 0.0, %v597
        %v599 = vpop.f32.mrb[0].mxu0
        %600 = vmatprep.mubr.bf16.mxu0 0
        %601 = vmatmul.mubr.bf16.gmra.mrb[0].mxu0 %v462
        %v602 = vpop.f32.mrb[0].mxu0
        %v603 = vadd.f32 0.0, %v602
        %v604 = vpop.f32.mrb[0].mxu0
        %v605 = vpop.f32.mrb[0].mxu0
        %v606 = vadd.f32 0.0, %v605
        %v607 = vpop.f32.mrb[0].mxu0
        %608 = vmatprep.mubr.bf16.mxu0 0
        %609 = vmatmul.mubr.bf16.gmra.mrb[0].mxu0 %v463
        %v610 = vpop.f32.mrb[0].mxu0
        %v611 = vadd.f32 0.0, %v610
        %v612 = vpop.f32.mrb[0].mxu0
        %v613 = vpop.f32.mrb[0].mxu0
        %v614 = vadd.f32 0.0, %v613
        %v615 = vpop.f32.mrb[0].mxu0
        %616 = vdwg.mxu0
        %v617 = vadd.f32 %v376, %v555
        %v618 = vadd.f32 %v377, %v558
        %v619 = vadd.f32 %v378, %v563
        %v620 = vadd.f32 %v379, %v566
        %v621 = vadd.f32 %v380, %v571
        %v622 = vadd.f32 %v381, %v574
        %v623 = vadd.f32 %v382, %v579
        %v624 = vadd.f32 %v383, %v582
        %v625 = vadd.f32 %v384, %v587
        %v626 = vadd.f32 %v385, %v590
        %v627 = vadd.f32 %v386, %v595
        %v628 = vadd.f32 %v387, %v598
        %v629 = vadd.f32 %v388, %v603
        %v630 = vadd.f32 %v389, %v606
        %v631 = vadd.f32 %v390, %v611
        %v632 = vadd.f32 %v391, %v614
        %633 = vst [vmem:[#allocation2] sm:$0xff] %v617
        %634 = vst [vmem:[#allocation2 + $0x8] sm:$0xff] %v618
        %635 = vst [vmem:[#allocation2 + $0x10] sm:$0xff] %v619
        %636 = vst [vmem:[#allocation2 + $0x18] sm:$0xff] %v620
        %637 = vst [vmem:[#allocation2 + $0x20] sm:$0xff] %v621
        %638 = vst [vmem:[#allocation2 + $0x28] sm:$0xff] %v622
        %639 = vst [vmem:[#allocation2 + $0x30] sm:$0xff] %v623
        %640 = vst [vmem:[#allocation2 + $0x38] sm:$0xff] %v624
        %641 = vst [vmem:[#allocation2 + $0x40] sm:$0xff] %v625
        %642 = vst [vmem:[#allocation2 + $0x48] sm:$0xff] %v626
        %643 = vst [vmem:[#allocation2 + $0x50] sm:$0xff] %v627
        %644 = vst [vmem:[#allocation2 + $0x58] sm:$0xff] %v628
        %645 = vst [vmem:[#allocation2 + $0x60] sm:$0xff] %v629
        %646 = vst [vmem:[#allocation2 + $0x68] sm:$0xff] %v630
        %647 = vst [vmem:[#allocation2 + $0x70] sm:$0xff] %v631
        %648 = vst [vmem:[#allocation2 + $0x78] sm:$0xff] %v632
        %p649 = scmp.eq.s32.totalorder %s31, 1
        // Predicated region
        $region61: #{tpu_custom_call.1} parent=39 // pred_check
          %p650 = pneg %p649
        $region62: #{tpu_custom_call.1} parent=39 // pred_check_branch
          %652 = sbr.rel (%p650) target = $region64
        $region63: #{tpu_custom_call.1} parent=39 // pred_region
          %v653 = vld [vmem:[#allocation2] sm:$0xff]
          %v654 = vld [vmem:[#allocation2 + $0x8] sm:$0xff]
          %v655 = vld [vmem:[#allocation2 + $0x10] sm:$0xff]
          %v656 = vld [vmem:[#allocation2 + $0x18] sm:$0xff]
          %v657 = vld [vmem:[#allocation2 + $0x20] sm:$0xff]
          %v658 = vld [vmem:[#allocation2 + $0x28] sm:$0xff]
          %v659 = vld [vmem:[#allocation2 + $0x30] sm:$0xff]
          %v660 = vld [vmem:[#allocation2 + $0x38] sm:$0xff]
          %v661 = vld [vmem:[#allocation2 + $0x40] sm:$0xff]
          %v662 = vld [vmem:[#allocation2 + $0x48] sm:$0xff]
          %v663 = vld [vmem:[#allocation2 + $0x50] sm:$0xff]
          %v664 = vld [vmem:[#allocation2 + $0x58] sm:$0xff]
          %v665 = vld [vmem:[#allocation2 + $0x60] sm:$0xff]
          %v666 = vld [vmem:[#allocation2 + $0x68] sm:$0xff]
          %v667 = vld [vmem:[#allocation2 + $0x70] sm:$0xff]
          %v668 = vld [vmem:[#allocation2 + $0x78] sm:$0xff]
          %v669 = vpack.c.bf16 %v654, %v653
          %v670 = vpack.c.bf16 %v656, %v655
          %v671 = vpack.c.bf16 %v658, %v657
          %v672 = vpack.c.bf16 %v660, %v659
          %v673 = vpack.c.bf16 %v662, %v661
          %v674 = vpack.c.bf16 %v664, %v663
          %v675 = vpack.c.bf16 %v666, %v665
          %v676 = vpack.c.bf16 %v668, %v667
          %v677 = vld [vmem:[%s310] sm:$0xf]
          %v678 = vld [vmem:[%s310 + $0x4] sm:$0xf]
          %v679 = vld [vmem:[%s310 + $0x8] sm:$0xf]
          %v680 = vld [vmem:[%s310 + $0xc] sm:$0xf]
          %v681 = vld [vmem:[%s310 + $0x10] sm:$0xf]
          %v682 = vld [vmem:[%s310 + $0x14] sm:$0xf]
          %v683 = vld [vmem:[%s310 + $0x18] sm:$0xf]
          %v684 = vld [vmem:[%s310 + $0x1c] sm:$0xf]
          %v685 = vld [vmem:[%s310 + $0x20] sm:$0xf]
          %v686 = vld [vmem:[%s310 + $0x24] sm:$0xf]
          %v687 = vld [vmem:[%s310 + $0x28] sm:$0xf]
          %v688 = vld [vmem:[%s310 + $0x2c] sm:$0xf]
          %v689 = vld [vmem:[%s310 + $0x30] sm:$0xf]
          %v690 = vld [vmem:[%s310 + $0x34] sm:$0xf]
          %v691 = vld [vmem:[%s310 + $0x38] sm:$0xf]
          %v692 = vld [vmem:[%s310 + $0x3c] sm:$0xf]
          %v709 = vunpack.c.l.b16 %v677
          %v710 = vunpack.c.l.b16 %v678
          %v711 = vunpack.c.l.b16 %v679
          %v712 = vunpack.c.l.b16 %v680
          %v713 = vunpack.c.l.b16 %v681
          %v714 = vunpack.c.l.b16 %v682
          %v715 = vunpack.c.l.b16 %v683
          %v716 = vunpack.c.l.b16 %v684
          %v717 = vunpack.c.l.b16 %v685
          %v718 = vunpack.c.l.b16 %v686
          %v719 = vunpack.c.l.b16 %v687
          %v720 = vunpack.c.l.b16 %v688
          %v721 = vunpack.c.l.b16 %v689
          %v722 = vunpack.c.l.b16 %v690
          %v723 = vunpack.c.l.b16 %v691
          %v724 = vunpack.c.l.b16 %v692
          %v725 = vpack.c.b16 %v710, %v709
          %v726 = vpack.c.b16 %v712, %v711
          %v727 = vpack.c.b16 %v714, %v713
          %v728 = vpack.c.b16 %v716, %v715
          %v729 = vpack.c.b16 %v718, %v717
          %v730 = vpack.c.b16 %v720, %v719
          %v731 = vpack.c.b16 %v722, %v721
          %v732 = vpack.c.b16 %v724, %v723
          %v741 = vld [vmem:[#allocation9] sm:$0xf]
          %v742 = vld [vmem:[#allocation9 + $0x4] sm:$0xf]
          %v743 = vld [vmem:[#allocation9 + $0x8] sm:$0xf]
          %v744 = vld [vmem:[#allocation9 + $0xc] sm:$0xf]
          %v745 = vld [vmem:[#allocation9 + $0x10] sm:$0xf]
          %v746 = vld [vmem:[#allocation9 + $0x14] sm:$0xf]
          %v747 = vld [vmem:[#allocation9 + $0x18] sm:$0xf]
          %v748 = vld [vmem:[#allocation9 + $0x1c] sm:$0xf]
          %v749 = vld [vmem:[#allocation9 + $0x20] sm:$0xf]
          %v750 = vld [vmem:[#allocation9 + $0x24] sm:$0xf]
          %v751 = vld [vmem:[#allocation9 + $0x28] sm:$0xf]
          %v752 = vld [vmem:[#allocation9 + $0x2c] sm:$0xf]
          %v753 = vld [vmem:[#allocation9 + $0x30] sm:$0xf]
          %v754 = vld [vmem:[#allocation9 + $0x34] sm:$0xf]
          %v755 = vld [vmem:[#allocation9 + $0x38] sm:$0xf]
          %v756 = vld [vmem:[#allocation9 + $0x3c] sm:$0xf]
          %v757 = vld [vmem:[#allocation9 + $0x40] sm:$0xf]
          %v758 = vld [vmem:[#allocation9 + $0x44] sm:$0xf]
          %v759 = vld [vmem:[#allocation9 + $0x48] sm:$0xf]
          %v760 = vld [vmem:[#allocation9 + $0x4c] sm:$0xf]
          %v761 = vld [vmem:[#allocation9 + $0x50] sm:$0xf]
          %v762 = vld [vmem:[#allocation9 + $0x54] sm:$0xf]
          %v763 = vld [vmem:[#allocation9 + $0x58] sm:$0xf]
          %v764 = vld [vmem:[#allocation9 + $0x5c] sm:$0xf]
          %v765 = vld [vmem:[#allocation9 + $0x60] sm:$0xf]
          %v766 = vld [vmem:[#allocation9 + $0x64] sm:$0xf]
          %v767 = vld [vmem:[#allocation9 + $0x68] sm:$0xf]
          %v768 = vld [vmem:[#allocation9 + $0x6c] sm:$0xf]
          %v769 = vld [vmem:[#allocation9 + $0x70] sm:$0xf]
          %v770 = vld [vmem:[#allocation9 + $0x74] sm:$0xf]
          %v771 = vld [vmem:[#allocation9 + $0x78] sm:$0xf]
          %v772 = vld [vmem:[#allocation9 + $0x7c] sm:$0xf]
          %v773 = vld [vmem:[%s4] sm:$0x1]
          %v775 = vlaneseq
          %v776 = vshrl.u32 %v775, 7
          %v777 = vsub.s32 0, %v776
          %v778 = vrot.slane %v773, %v777
          %v812 = vunpack.c.l.b16 %v741
          %v813 = vunpack.c.l.b16 %v742
          %v814 = vunpack.c.l.b16 %v743
          %v815 = vunpack.c.l.b16 %v744
          %v816 = vunpack.c.l.b16 %v745
          %v817 = vunpack.c.l.b16 %v746
          %v818 = vunpack.c.l.b16 %v747
          %v819 = vunpack.c.l.b16 %v748
          %v820 = vunpack.c.l.b16 %v749
          %v821 = vunpack.c.l.b16 %v750
          %v822 = vunpack.c.l.b16 %v751
          %v823 = vunpack.c.l.b16 %v752
          %v824 = vunpack.c.l.b16 %v753
          %v825 = vunpack.c.l.b16 %v754
          %v826 = vunpack.c.l.b16 %v755
          %v827 = vunpack.c.l.b16 %v756
          %v828 = vunpack.c.l.b16 %v757
          %v829 = vunpack.c.l.b16 %v758
          %v830 = vunpack.c.l.b16 %v759
          %v831 = vunpack.c.l.b16 %v760
          %v832 = vunpack.c.l.b16 %v761
          %v833 = vunpack.c.l.b16 %v762
          %v834 = vunpack.c.l.b16 %v763
          %v835 = vunpack.c.l.b16 %v764
          %v836 = vunpack.c.l.b16 %v765
          %v837 = vunpack.c.l.b16 %v766
          %v838 = vunpack.c.l.b16 %v767
          %v839 = vunpack.c.l.b16 %v768
          %v840 = vunpack.c.l.b16 %v769
          %v841 = vunpack.c.l.b16 %v770
          %v842 = vunpack.c.l.b16 %v771
          %v843 = vunpack.c.l.b16 %v772
          %v844 = vpack.c.b16 %v813, %v812
          %v845 = vpack.c.b16 %v815, %v814
          %v846 = vpack.c.b16 %v817, %v816
          %v847 = vpack.c.b16 %v819, %v818
          %v848 = vpack.c.b16 %v821, %v820
          %v849 = vpack.c.b16 %v823, %v822
          %v850 = vpack.c.b16 %v825, %v824
          %v851 = vpack.c.b16 %v827, %v826
          %v852 = vpack.c.b16 %v829, %v828
          %v853 = vpack.c.b16 %v831, %v830
          %v854 = vpack.c.b16 %v833, %v832
          %v855 = vpack.c.b16 %v835, %v834
          %v856 = vpack.c.b16 %v837, %v836
          %v857 = vpack.c.b16 %v839, %v838
          %v858 = vpack.c.b16 %v841, %v840
          %v859 = vpack.c.b16 %v843, %v842
          %876 = vmatprep.subr.bf16.mxu0 0
          %877 = vmatpush1.bf16.msra.mxu0 %v844
          %878 = vmatprep.subr.bf16.mxu0 0
          %879 = vmatpush1.bf16.msra.mxu0 %v845
          %880 = vmatprep.subr.bf16.mxu0 0
          %881 = vmatpush1.bf16.msra.mxu0 %v846
          %882 = vmatprep.subr.bf16.mxu0 0
          %883 = vmatpush1.bf16.msra.mxu0 %v847
          %884 = vmatprep.subr.bf16.mxu0 0
          %885 = vmatpush1.bf16.msra.mxu0 %v848
          %886 = vmatprep.subr.bf16.mxu0 0
          %887 = vmatpush1.bf16.msra.mxu0 %v849
          %888 = vmatprep.subr.bf16.mxu0 0
          %889 = vmatpush1.bf16.msra.mxu0 %v850
          %890 = vmatprep.subr.bf16.mxu0 0
          %891 = vmatpush1.bf16.msra.mxu0 %v851
          %892 = vmatprep.subr.bf16.mxu0 0
          %893 = vmatpush1.bf16.msra.mxu0 %v852
          %894 = vmatprep.subr.bf16.mxu0 0
          %895 = vmatpush1.bf16.msra.mxu0 %v853
          %896 = vmatprep.subr.bf16.mxu0 0
          %897 = vmatpush1.bf16.msra.mxu0 %v854
          %898 = vmatprep.subr.bf16.mxu0 0
          %899 = vmatpush1.bf16.msra.mxu0 %v855
          %900 = vmatprep.subr.bf16.mxu0 0
          %901 = vmatpush1.bf16.msra.mxu0 %v856
          %902 = vmatprep.subr.bf16.mxu0 0
          %903 = vmatpush1.bf16.msra.mxu0 %v857
          %904 = vmatprep.subr.bf16.mxu0 0
          %905 = vmatpush1.bf16.msra.mxu0 %v858
          %906 = vmatprep.subr.bf16.mxu0 0
          %907 = vmatpush1.bf16.msra.mxu0 %v859
          %908 = vmatprep.mubr.bf16.mxu0 %v669
          %909 = vmatmul.mubr.bf16.gmra.mrb[0].mxu0 %v725
          %v910 = vpop.f32.mrb[0].mxu0
          %v911 = vadd.f32 %v778, %v910
          %v912 = vpop.f32.mrb[0].mxu0
          %v913 = vpop.f32.mrb[0].mxu0
          %v914 = vadd.f32 %v778, %v913
          %v915 = vpop.f32.mrb[0].mxu0
          %916 = vmatprep.mubr.bf16.mxu0 %v670
          %917 = vmatmul.mubr.bf16.gmra.mrb[0].mxu0 %v726
          %v918 = vpop.f32.mrb[0].mxu0
          %v919 = vadd.f32 %v778, %v918
          %v920 = vpop.f32.mrb[0].mxu0
          %v921 = vpop.f32.mrb[0].mxu0
          %v922 = vadd.f32 %v778, %v921
          %v923 = vpop.f32.mrb[0].mxu0
          %924 = vmatprep.mubr.bf16.mxu0 %v671
          %925 = vmatmul.mubr.bf16.gmra.mrb[0].mxu0 %v727
          %v926 = vpop.f32.mrb[0].mxu0
          %v927 = vadd.f32 %v778, %v926
          %v928 = vpop.f32.mrb[0].mxu0
          %v929 = vpop.f32.mrb[0].mxu0
          %v930 = vadd.f32 %v778, %v929
          %v931 = vpop.f32.mrb[0].mxu0
          %932 = vmatprep.mubr.bf16.mxu0 %v672
          %933 = vmatmul.mubr.bf16.gmra.mrb[0].mxu0 %v728
          %v934 = vpop.f32.mrb[0].mxu0
          %v935 = vadd.f32 %v778, %v934
          %v936 = vpop.f32.mrb[0].mxu0
          %v937 = vpop.f32.mrb[0].mxu0
          %v938 = vadd.f32 %v778, %v937
          %v939 = vpop.f32.mrb[0].mxu0
          %940 = vmatprep.mubr.bf16.mxu0 %v673
          %941 = vmatmul.mubr.bf16.gmra.mrb[0].mxu0 %v729
          %v942 = vpop.f32.mrb[0].mxu0
          %v943 = vadd.f32 %v778, %v942
          %v944 = vpop.f32.mrb[0].mxu0
          %v945 = vpop.f32.mrb[0].mxu0
          %v946 = vadd.f32 %v778, %v945
          %v947 = vpop.f32.mrb[0].mxu0
          %948 = vmatprep.mubr.bf16.mxu0 %v674
          %949 = vmatmul.mubr.bf16.gmra.mrb[0].mxu0 %v730
          %v950 = vpop.f32.mrb[0].mxu0
          %v951 = vadd.f32 %v778, %v950
          %v952 = vpop.f32.mrb[0].mxu0
          %v953 = vpop.f32.mrb[0].mxu0
          %v954 = vadd.f32 %v778, %v953
          %v955 = vpop.f32.mrb[0].mxu0
          %956 = vmatprep.mubr.bf16.mxu0 %v675
          %957 = vmatmul.mubr.bf16.gmra.mrb[0].mxu0 %v731
          %v958 = vpop.f32.mrb[0].mxu0
          %v959 = vadd.f32 %v778, %v958
          %v960 = vpop.f32.mrb[0].mxu0
          %v961 = vpop.f32.mrb[0].mxu0
          %v962 = vadd.f32 %v778, %v961
          %v963 = vpop.f32.mrb[0].mxu0
          %964 = vmatprep.mubr.bf16.mxu0 %v676
          %965 = vmatmul.mubr.bf16.gmra.mrb[0].mxu0 %v732
          %v966 = vpop.f32.mrb[0].mxu0
          %v967 = vadd.f32 %v778, %v966
          %v968 = vpop.f32.mrb[0].mxu0
          %v969 = vpop.f32.mrb[0].mxu0
          %v970 = vadd.f32 %v778, %v969
          %v971 = vpop.f32.mrb[0].mxu0
          %972 = vdwg.mxu0
          %v973 = vmax.f32 %v911, 0.0
          %v974 = vmax.f32 %v914, 0.0
          %v975 = vmax.f32 %v919, 0.0
          %v976 = vmax.f32 %v922, 0.0
          %v977 = vmax.f32 %v927, 0.0
          %v978 = vmax.f32 %v930, 0.0
          %v979 = vmax.f32 %v935, 0.0
          %v980 = vmax.f32 %v938, 0.0
          %v981 = vmax.f32 %v943, 0.0
          %v982 = vmax.f32 %v946, 0.0
          %v983 = vmax.f32 %v951, 0.0
          %v984 = vmax.f32 %v954, 0.0
          %v985 = vmax.f32 %v959, 0.0
          %v986 = vmax.f32 %v962, 0.0
          %v987 = vmax.f32 %v967, 0.0
          %v988 = vmax.f32 %v970, 0.0
          %v989 = vpack.c.bf16 %v974, %v973
          %v990 = vpack.c.bf16 %v976, %v975
          %v991 = vpack.c.bf16 %v978, %v977
          %v992 = vpack.c.bf16 %v980, %v979
          %v993 = vpack.c.bf16 %v982, %v981
          %v994 = vpack.c.bf16 %v984, %v983
          %v995 = vpack.c.bf16 %v986, %v985
          %v996 = vpack.c.bf16 %v988, %v987
          %v1005 = vunpack.c.l.b16 %v989
          %v1006 = vunpack.c.h.b16 %v989
          %v1007 = vunpack.c.l.b16 %v990
          %v1008 = vunpack.c.h.b16 %v990
          %v1009 = vunpack.c.l.b16 %v991
          %v1010 = vunpack.c.h.b16 %v991
          %v1011 = vunpack.c.l.b16 %v992
          %v1012 = vunpack.c.h.b16 %v992
          %v1013 = vunpack.c.l.b16 %v993
          %v1014 = vunpack.c.h.b16 %v993
          %v1015 = vunpack.c.l.b16 %v994
          %v1016 = vunpack.c.h.b16 %v994
          %v1017 = vunpack.c.l.b16 %v995
          %v1018 = vunpack.c.h.b16 %v995
          %v1019 = vunpack.c.l.b16 %v996
          %v1020 = vunpack.c.h.b16 %v996
          %v1021 = vpack.c.b16 %v1005, %v1005
          %v1022 = vpack.c.b16 %v1006, %v1006
          %v1023 = vpack.c.b16 %v1007, %v1007
          %v1024 = vpack.c.b16 %v1008, %v1008
          %v1025 = vpack.c.b16 %v1009, %v1009
          %v1026 = vpack.c.b16 %v1010, %v1010
          %v1027 = vpack.c.b16 %v1011, %v1011
          %v1028 = vpack.c.b16 %v1012, %v1012
          %v1029 = vpack.c.b16 %v1013, %v1013
          %v1030 = vpack.c.b16 %v1014, %v1014
          %v1031 = vpack.c.b16 %v1015, %v1015
          %v1032 = vpack.c.b16 %v1016, %v1016
          %v1033 = vpack.c.b16 %v1017, %v1017
          %v1034 = vpack.c.b16 %v1018, %v1018
          %v1035 = vpack.c.b16 %v1019, %v1019
          %v1036 = vpack.c.b16 %v1020, %v1020
          %1053 = vst [vmem:[%s350] sm:$0xf] %v1021
          %1054 = vst [vmem:[%s350 + $0x4] sm:$0xf] %v1022
          %1055 = vst [vmem:[%s350 + $0x8] sm:$0xf] %v1023
          %1056 = vst [vmem:[%s350 + $0xc] sm:$0xf] %v1024
          %1057 = vst [vmem:[%s350 + $0x10] sm:$0xf] %v1025
          %1058 = vst [vmem:[%s350 + $0x14] sm:$0xf] %v1026
          %1059 = vst [vmem:[%s350 + $0x18] sm:$0xf] %v1027
          %1060 = vst [vmem:[%s350 + $0x1c] sm:$0xf] %v1028
          %1061 = vst [vmem:[%s350 + $0x20] sm:$0xf] %v1029
          %1062 = vst [vmem:[%s350 + $0x24] sm:$0xf] %v1030
          %1063 = vst [vmem:[%s350 + $0x28] sm:$0xf] %v1031
          %1064 = vst [vmem:[%s350 + $0x2c] sm:$0xf] %v1032
          %1065 = vst [vmem:[%s350 + $0x30] sm:$0xf] %v1033
          %1066 = vst [vmem:[%s350 + $0x34] sm:$0xf] %v1034
          %1067 = vst [vmem:[%s350 + $0x38] sm:$0xf] %v1035
          %1068 = vst [vmem:[%s350 + $0x3c] sm:$0xf] %v1036
        $region64: #{tpu_custom_call.1} parent=39 // pred_fallthru
          _
        %s1069 = sand.u32 %s168, 1
        %s1070 = scalar_lea.sflag [#allocation5], %s1069
        %s1071 = sand.u32 %s168, 1
        %s1072 = smul.addr %s1071, 64
        %s1073 = scalar_lea.vmem [#allocation11], %s1072
        // Predicated region
        $region65: #{tpu_custom_call.1} parent=39 // pred_check
          %p1074 = pneg %p178
        $region66: #{tpu_custom_call.1} parent=39 // pred_check_branch
          %1076 = sbr.rel (%p1074) target = $region68
        $region67: #{tpu_custom_call.1} parent=39 // pred_region
          %s1077 = smul.u32 16, %s30
          %s1079 = ssub.s32 1024, 1024
          %1080 = vsyncadd %s1070, %s1079
          %s1081 = smul.addr %s1077, 64
          %s1082 = scalar_lea.hbm %s5, %s1081
          %s1083 = sshll.u32 %s1073, 4
          %s1084 = int_to_ptr.vmem [resolvable:$true] %s1083
          %1089 = dma.vmem_to_hbm [thread:$0]  %s1084, 1024, %s1082, %s1070, 64, 64, 4
        $region68: #{tpu_custom_call.1} parent=39 // pred_fallthru
          _
      $region40: #{tpu_custom_call.1} parent=5 // pred_fallthru
        _
      %p1090 = scmp.le.s32.totalorder 2, %s21
      // Predicated region
      $region69: #{tpu_custom_call.1} parent=5 // pred_check
        %p1091 = pneg %p1090
      $region70: #{tpu_custom_call.1} parent=5 // pred_check_branch
        %1093 = sbr.rel (%p1091) target = $region72
      $region71: #{tpu_custom_call.1} parent=5 // pred_region
        %s1094 = ssub.s32 %s21, 2
        // Predicated region
        $region73: #{tpu_custom_call.1} parent=71 // pred_check
          %p1095 = pneg %p184
        $region74: #{tpu_custom_call.1} parent=71 // pred_check_branch
          %1097 = sbr.rel (%p1095) target = $region76
        $region75: #{tpu_custom_call.1} parent=71 // pred_region
          %s1098 = sand.u32 %s169, 1
          %s1099 = scalar_lea.sflag [#allocation5], %s1098
          %s1100 = sand.u32 %s169, 1
          %s1101 = smul.addr %s1100, 64
          %s1102 = scalar_lea.vmem [#allocation11], %s1101
          %1103 = dma.done %s1099, 1024
        $region76: #{tpu_custom_call.1} parent=71 // pred_fallthru
          _
      $region72: #{tpu_custom_call.1} parent=5 // pred_fallthru
        _
    $region6: #{tpu_custom_call.1} parent=1 // loop_footer
      %s25 = sadd.s32 1, %s21
    $region7: #{tpu_custom_call.1} parent=1 // loop_footer_branch
      %20 = sbr.rel target = $region3
    $region8: #{tpu_custom_call.1} parent=1 // loop_exit
      _
    %1104 = vsyncpa [#allocation4], 1
    %s1105 = scalar_lea.sflag [#allocation4], 1
    %1106 = vsyncpa %s1105, 1
    %1107 = vsyncpa [#allocation7], 1
    %s1108 = scalar_lea.sflag [#allocation7], 1
    %1109 = vsyncpa %s1108, 1
    %1110 = vsyncpa [#allocation10], 1
    %1111 = vsyncpa [#allocation5], 1
    %s1112 = scalar_lea.sflag [#allocation5], 1
    %1113 = vsyncpa %s1112, 1

</llo_original>
